<compile_context>
chip_gen: v7x
topology: tpu7x:2x2x1
jax: 0.10.0
libtpu: 0.0.40
codegen_flags: <defaults>
</compile_context>

<pallas_src>
import functools

import jax
import jax.numpy as jnp
from jax.experimental import pallas as pl
from jax.experimental.pallas import tpu as pltpu


_RSUB = 8          # rows per in-kernel sub-tile (one sublane group)
_TV_MAX = 2048     # vocab lanes per grid step (keeps live vregs << 64)


def _round_up(x, m):
    return ((x + m - 1) // m) * m


def _accuracy_kernel(logits_ref, targets_ref, out_ref, max_sc, idx_sc, *,
                     total_rows, vocab, tm, tv):
    """Grid = (row_tiles, vocab_tiles); vocab axis last + 'arbitrary'.

    logits_ref:  (tm, tv)     native-dtype VMEM block
    targets_ref: (tm, 1)      int32 VMEM block (same block for every k)
    out_ref:     (1, 8, 128)  int32 per-row-tile partial (written at k == last)
    max_sc:      (tm, 1) f32  running row max       (persists across k)
    idx_sc:      (tm, 1) i32  running row argmax    (persists across k)
    """
    i = pl.program_id(0)                 # row-tile index   ("parallel")
    k = pl.program_id(1)                 # vocab-tile index ("arbitrary", last)
    nk = pl.num_programs(1)
    is_last = k == nk - 1

    @pl.when(k == 0)
    def _():
        max_sc[...] = jnp.full(max_sc.shape, -jnp.inf, jnp.float32)
        idx_sc[...] = jnp.zeros(idx_sc.shape, jnp.int32)

    n_sub = tm // _RSUB
    # Hoisted once per grid step (JAX does not CSE broadcast_in_dim).
    col = jax.lax.broadcasted_iota(jnp.int32, (_RSUB, tv), 1)
    ragged_v = (vocab % tv) != 0         # static Python bool
    lanes_left = vocab - k * tv          # only consumed when ragged_v

    def body(s, acc):
        r0 = pl.multiple_of(s * _RSUB, _RSUB)
        x = logits_ref[pl.ds(r0, _RSUB), :]            # (_RSUB, tv), native dtype
        if ragged_v:
            # Last vocab tile may overhang V: mask the padding lanes.
            x = jnp.where(col < lanes_left, x,
                          jnp.array(-jnp.inf, dtype=x.dtype))

        # Chunk-local argmax with FIRST-maximal-index tie rule (torch.argmax).
        cmax = jnp.max(x, axis=-1, keepdims=True)                     # (_RSUB,1)
        first = jnp.min(jnp.where(x == cmax, col, jnp.int32(tv)),
                        axis=-1, keepdims=True)                       # (_RSUB,1)
        cmax32 = cmax.astype(jnp.float32)

        # Merge with the running (max, argmax) carried across vocab tiles.
        # Strict '>' keeps the earliest (lowest-index) maximum.
        run_max = max_sc[pl.ds(r0, _RSUB), :]
        run_idx = idx_sc[pl.ds(r0, _RSUB), :]
        take = cmax32 > run_max
        new_max = jnp.where(take, cmax32, run_max)
        new_idx = jnp.where(take, first + k * tv, run_idx)
        max_sc[pl.ds(r0, _RSUB), :] = new_max
        idx_sc[pl.ds(r0, _RSUB), :] = new_idx

        # Hit count for this sub-tile; only the value from the last vocab
        # tile is accumulated (the check itself is a handful of (8,1) ops).
        t = targets_ref[pl.ds(r0, _RSUB), :]                          # (_RSUB,1)
        row = (i * tm + s * _RSUB
               + jax.lax.broadcasted_iota(jnp.int32, (_RSUB, 1), 0))
        hit = jnp.logical_and(new_idx == t, row < total_rows)
        n_hit = jnp.sum(hit.astype(jnp.int32))
        return acc + jnp.where(is_last, n_hit, jnp.int32(0))

    partial = jax.lax.fori_loop(0, n_sub, body, jnp.int32(0))

    @pl.when(is_last)
    def _():
        out_ref[...] = jnp.broadcast_to(partial, out_ref.shape)


def _tile_params(rows, vocab, elt_size, vmem_cap):
    """Pick (tm, tv) row/vocab tile sizes from the chip's VMEM capacity."""
    tv = vocab if vocab <= _TV_MAX else _TV_MAX
    tv_lanes = _round_up(tv, 128)        # lane-padded VMEM footprint

    # Logits double-buffer budget, per generation:
    #   v5e / v6e (128 MiB VMEM): ~1/3 of VMEM.
    #   v7x       ( 64 MiB VMEM): keep DB blocks + scratch under ~40-48 MiB.
    if vmem_cap >= (100 << 20):
        db_budget = vmem_cap // 3
    else:
        db_budget = min(vmem_cap * 9 // 16, 36 << 20)

    tm = db_budget // (2 * tv_lanes * elt_size)
    tm = max(8, min((tm // 8) * 8, 4096))
    # v7x has 2 TensorCores: keep >= ~4 row tiles so the "parallel" axis can
    # actually be sharded (only binds for small/medium batches).
    tm = min(tm, max(8, _round_up(pl.cdiv(rows, 4), 8)))
    tm = min(tm, max(8, _round_up(rows, 8)))
    return tm, tv, tv_lanes


def accuracy_2d(logits, targets):
    """correct = sum(targets == argmax(logits, -1)) via a Pallas TPU kernel.

    logits:  [B, S, V] float (f32 or bf16 — streamed in its native dtype)
    targets: [B, S]    integer
    returns: scalar int32 count of correct predictions
    """
    B, S, V = logits.shape
    rows = B * S
    elt = jnp.dtype(logits.dtype).itemsize

    try:
        vmem_cap = int(pltpu.get_tpu_info().vmem_capacity_bytes)
    except Exception:
        vmem_cap = 64 << 20              # conservative (v7x-sized VMEM)

    tm, tv, tv_lanes = _tile_params(rows, V, elt, vmem_cap)
    ni = pl.cdiv(rows, tm)
    nk = pl.cdiv(V, tv)

    logits2d = logits.reshape(rows, V)                 # vocab -> lane axis
    targets2d = targets.reshape(rows, 1).astype(jnp.int32)

    # VMEM accounting: every resident buffer, per generation budget above.
    needed = (2 * tm * tv_lanes * elt     # logits double buffer
              + 2 * tm * 512              # targets (tm,1) i32, lane padded
              + 2 * tm * 512              # scratch: run_max f32 + run_idx i32
              + 2 * 8 * 128 * 4)          # per-row-tile output block
    vmem_limit = int(min(max(needed + (8 << 20), 16 << 20),
                         vmem_cap * 3 // 4))

    cost = pl.CostEstimate(
        flops=int(3 * rows * V),
        transcendentals=0,
        bytes_accessed=int(rows * V * elt + rows * 4 + ni * 8 * 128 * 4),
    )

    kernel = functools.partial(_accuracy_kernel, total_rows=rows, vocab=V,
                               tm=tm, tv=tv)

    out = pl.pallas_call(
        kernel,
        out_shape=jax.ShapeDtypeStruct((ni, 8, 128), jnp.int32),
        grid_spec=pltpu.PrefetchScalarGridSpec(
            num_scalar_prefetch=0,
            grid=(ni, nk),
            in_specs=[
                pl.BlockSpec((tm, tv), lambda i, k: (i, k)),
                pl.BlockSpec((tm, 1), lambda i, k: (i, 0)),
            ],
            out_specs=pl.BlockSpec((1, 8, 128), lambda i, k: (i, 0, 0)),
            scratch_shapes=[
                pltpu.VMEM((tm, 1), jnp.float32),      # running row max
                pltpu.VMEM((tm, 1), jnp.int32),        # running row argmax
            ],
        ),
        compiler_params=pltpu.CompilerParams(
            dimension_semantics=("parallel", "arbitrary"),
            vmem_limit_bytes=vmem_limit,
        ),
        cost_estimate=cost,
    )(logits2d, targets2d)

    # Final reduction over per-row-tile partials (tiny) in plain JAX.
    correct = jnp.sum(out[:, 0, 0]).astype(jnp.int32)

    # TODO(synk): split_batch_2d / reduce_by_batch_2d are 2D tensor-parallel
    # collectives — identity on a single device (no 2D mesh here).
    return correct


if __name__ == "__main__":
    key = jax.random.PRNGKey(0)
    B, S, V = 2, 8, 32
    k1, k2 = jax.random.split(key)
    logits = jax.random.normal(k1, (B, S, V), dtype=jnp.float32)
    targets = jax.random.randint(k2, (B, S), 0, V, dtype=jnp.int32)

    correct = accuracy_2d(logits, targets)
    correct = jax.block_until_ready(correct)

    # Reference check (pure JAX).
    ref = jnp.sum((jnp.argmax(logits, axis=-1).astype(jnp.int32) == targets)
                  .astype(jnp.int32))
    assert int(correct) == int(ref), (int(correct), int(ref))

    print("KERNEL_OK")
</pallas_src>

<mosaic_0001>
module attributes {stable_mosaic.version = 11 : i64} {
  func.func @_accuracy_kernel(%arg0: i32, %arg1: i32, %arg2: memref<8x32xf32, #tpu.memory_space<vmem>>, %arg3: memref<8x1xi32, #tpu.memory_space<vmem>>, %arg4: memref<1x8x128xi32, #tpu.memory_space<vmem>>, %arg5: memref<8x1xf32, #tpu.memory_space<vmem>>, %arg6: memref<8x1xi32, #tpu.memory_space<vmem>>) attributes {dimension_semantics = [#tpu.dimension_semantics<parallel>, #tpu.dimension_semantics<arbitrary>], iteration_bounds = array<i64: 2, 1>, scalar_prefetch = 0 : i64, scratch_operands = 2 : i64, tpu.core_type = #tpu.core_type<tc>, window_params = [{transform_indices = @transform_0, window_bounds = array<i64: 8, 32>}, {transform_indices = @transform_1, window_bounds = array<i64: 8, 1>}, {transform_indices = @transform_2, window_bounds = array<i64: 1, 8, 128>}]} {
    %c0_i32 = arith.constant 0 : i32
    %0 = arith.cmpi eq, %arg1, %c0_i32 : i32
    %c0_i32_0 = arith.constant 0 : i32
    %1 = arith.cmpi eq, %arg1, %c0_i32_0 : i32
    %2 = arith.extui %1 : i1 to i32
    %c0_i32_1 = arith.constant 0 : i32
    %3 = arith.cmpi ne, %2, %c0_i32_1 : i32
    scf.if %3 {
      %cst_16 = arith.constant 0xFF800000 : f32
      %52 = vector.broadcast %cst_16 : f32 to vector<8x1xf32>
      %c0_17 = arith.constant 0 : index
      %c0_18 = arith.constant 0 : index
      %53 = vector.load %arg5[%c0_17, %c0_18] : memref<8x1xf32, #tpu.memory_space<vmem>>, vector<8x1xf32>
      tpu.vector_store %arg5[%c0_17, %c0_18], %52 {strides = array<i32>} : memref<8x1xf32, #tpu.memory_space<vmem>>, vector<8x1xf32>,
      %c0_i32_19 = arith.constant 0 : i32
      %54 = vector.broadcast %c0_i32_19 : i32 to vector<8x1xi32>
      %c0_20 = arith.constant 0 : index
      %c0_21 = arith.constant 0 : index
      %55 = vector.load %arg6[%c0_20, %c0_21] : memref<8x1xi32, #tpu.memory_space<vmem>>, vector<8x1xi32>
      tpu.vector_store %arg6[%c0_20, %c0_21], %54 {strides = array<i32>} : memref<8x1xi32, #tpu.memory_space<vmem>>, vector<8x1xi32>,
    } else {
    }
    %4 = tpu.iota {dimensions = array<i32: 1>} : vector<8x32xi32>
    %c0_i32_2 = arith.constant 0 : i32
    %c0_i32_3 = arith.constant 0 : i32
    %c8_i32 = arith.constant 8 : i32
    %5 = arith.muli %c0_i32_3, %c8_i32 : i32
    %6 = tpu.assume_multiple %5, 8 : i32
    %7 = arith.index_cast %6 : i32 to index
    %c0 = arith.constant 0 : index
    %8 = vector.load %arg2[%7, %c0] : memref<8x32xf32, #tpu.memory_space<vmem>>, vector<8x32xf32>
    %cst = arith.constant dense<0xFF800000> : vector<8xf32>
    %9 = vector.multi_reduction <maximumf>, %8, %cst [1] : vector<8x32xf32> to vector<8xf32>
    %10 = vector.shape_cast %9 : vector<8xf32> to vector<8x1xf32>
    %11 = vector.broadcast %10 : vector<8x1xf32> to vector<8x32xf32>
    %12 = arith.cmpf oeq, %8, %11 : vector<8x32xf32>
    %c32_i32 = arith.constant 32 : i32
    %13 = vector.broadcast %c32_i32 : i32 to vector<8x32xi32>
    %14 = arith.select %12, %4, %13 : vector<8x32xi1>, vector<8x32xi32>
    %cst_4 = arith.constant dense<2147483647> : vector<8xi32>
    %15 = vector.multi_reduction <minsi>, %14, %cst_4 [1] : vector<8x32xi32> to vector<8xi32>
    %16 = vector.shape_cast %15 : vector<8xi32> to vector<8x1xi32>
    %17 = arith.index_cast %6 : i32 to index
    %c0_5 = arith.constant 0 : index
    %18 = vector.load %arg5[%17, %c0_5] : memref<8x1xf32, #tpu.memory_space<vmem>>, vector<8x1xf32>
    %19 = arith.index_cast %6 : i32 to index
    %c0_6 = arith.constant 0 : index
    %20 = vector.load %arg6[%19, %c0_6] : memref<8x1xi32, #tpu.memory_space<vmem>>, vector<8x1xi32>
    %21 = arith.cmpf ogt, %10, %18 : vector<8x1xf32>
    %22 = arith.select %21, %10, %18 : vector<8x1xi1>, vector<8x1xf32>
    %c32_i32_7 = arith.constant 32 : i32
    %23 = arith.muli %arg1, %c32_i32_7 : i32
    %24 = vector.broadcast %23 : i32 to vector<8x1xi32>
    %25 = arith.addi %16, %24 : vector<8x1xi32>
    %26 = arith.select %21, %25, %20 : vector<8x1xi1>, vector<8x1xi32>
    %27 = arith.index_cast %6 : i32 to index
    %c0_8 = arith.constant 0 : index
    %28 = vector.load %arg5[%27, %c0_8] : memref<8x1xf32, #tpu.memory_space<vmem>>, vector<8x1xf32>
    tpu.vector_store %arg5[%27, %c0_8], %22 {strides = array<i32>} : memref<8x1xf32, #tpu.memory_space<vmem>>, vector<8x1xf32>,
    %29 = arith.index_cast %6 : i32 to index
    %c0_9 = arith.constant 0 : index
    %30 = vector.load %arg6[%29, %c0_9] : memref<8x1xi32, #tpu.memory_space<vmem>>, vector<8x1xi32>
    tpu.vector_store %arg6[%29, %c0_9], %26 {strides = array<i32>} : memref<8x1xi32, #tpu.memory_space<vmem>>, vector<8x1xi32>,
    %31 = arith.index_cast %6 : i32 to index
    %c0_10 = arith.constant 0 : index
    %32 = vector.load %arg3[%31, %c0_10] : memref<8x1xi32, #tpu.memory_space<vmem>>, vector<8x1xi32>
    %c8_i32_11 = arith.constant 8 : i32
    %33 = arith.muli %arg0, %c8_i32_11 : i32
    %c8_i32_12 = arith.constant 8 : i32
    %34 = arith.muli %c0_i32_3, %c8_i32_12 : i32
    %35 = arith.addi %33, %34 : i32
    %36 = tpu.iota {dimensions = array<i32: 0>} : vector<8x1xi32>
    %37 = vector.broadcast %35 : i32 to vector<8x1xi32>
    %38 = arith.addi %37, %36 : vector<8x1xi32>
    %39 = arith.cmpi eq, %26, %32 : vector<8x1xi32>
    %c16_i32 = arith.constant 16 : i32
    %40 = vector.broadcast %c16_i32 : i32 to vector<8x1xi32>
    %41 = arith.cmpi slt, %38, %40 : vector<8x1xi32>
    %42 = arith.andi %39, %41 : vector<8x1xi1>
    %43 = arith.extui %42 : vector<8x1xi1> to vector<8x1xi32>
    %44 = vector.shape_cast %43 : vector<8x1xi32> to vector<1x8x1xi32>
    %cst_13 = arith.constant dense<0> : vector<1xi32>
    %45 = vector.multi_reduction <add>, %44, %cst_13 [1, 2] : vector<1x8x1xi32> to vector<1xi32>
    %46 = vector.shape_cast %45 : vector<1xi32> to vector<1x1x1xi32>
    %47 = vector.extract %46[0, 0, 0] : i32 from vector<1x1x1xi32>
    %c0_i32_14 = arith.constant 0 : i32
    %48 = arith.select %0, %47, %c0_i32_14 : i32
    %49 = arith.addi %c0_i32_2, %48 : i32
    %c1_i32 = arith.constant 1 : i32
    %50 = arith.extui %0 : i1 to i32
    %c0_i32_15 = arith.constant 0 : i32
    %51 = arith.cmpi ne, %50, %c0_i32_15 : i32
    scf.if %51 {
      %52 = vector.broadcast %49 : i32 to vector<1x8x128xi32>
      %c0_16 = arith.constant 0 : index
      %c0_17 = arith.constant 0 : index
      %c0_18 = arith.constant 0 : index
      %53 = vector.load %arg4[%c0_16, %c0_17, %c0_18] : memref<1x8x128xi32, #tpu.memory_space<vmem>>, vector<1x8x128xi32>
      tpu.vector_store %arg4[%c0_16, %c0_17, %c0_18], %52 {strides = array<i32>} : memref<1x8x128xi32, #tpu.memory_space<vmem>>, vector<1x8x128xi32>,
    } else {
    }
    return
  }
  func.func @transform_0(%arg0: i32, %arg1: i32) -> (i32, i32) {
    %c0_i32 = arith.constant 0 : i32
    return %arg0, %arg1 : i32, i32
  }
  func.func @transform_1(%arg0: i32, %arg1: i32) -> (i32, i32) {
    %c0_i32 = arith.constant 0 : i32
    %c0_i32_0 = arith.constant 0 : i32
    return %arg0, %c0_i32 : i32, i32
  }
  func.func @transform_2(%arg0: i32, %arg1: i32) -> (i32, i32, i32) {
    %c0_i32 = arith.constant 0 : i32
    %c0_i32_0 = arith.constant 0 : i32
    %c0_i32_1 = arith.constant 0 : i32
    return %arg0, %c0_i32, %c0_i32_0 : i32, i32, i32
  }
}

</mosaic_0001>

<llo_original>
// kernel: tpu_custom_call.1
$region0: #{tpu_custom_call.1}
  #allocation0 [shape = 'u32[]', space=smem, size = 0x4, offset = 0x4, fixed_abs, tag = 'smem constant byte address 0x4 - core index']
  #allocation1 [shape = 'u32[144,128]{1,0:T(1,128)}', space=vmem, size = 0x12000, scoped, tag = 'internal scratch']
  #allocation2 [shape = 'f32[8,1]{1,0:T(8,128)}', space=vmem, size = 0x1000, scoped, tag = 'scratch operand']
  #allocation3 [shape = 's32[8,1]{1,0:T(8,128)}', space=vmem, size = 0x1000, scoped, tag = 'scratch operand']
  %s0 = inlined_call_operand.vmem [shape: f32[16,32], index: 0, kind: input, shape index: {}]
  %s1 = inlined_call_operand.vmem [shape: s32[16,1], index: 1, kind: input, shape index: {}]
  %s2 = inlined_call_operand.hbm [shape: s32[2,8,128], index: 2, kind: output, shape index: {}]
  %s3 = sld [smem:[#allocation0]]
  $region49: #{tpu_custom_call.1} parent=0
    _
  %s5 = ssub.s32 1, %s3
  %s6 = scalar_select 0, %s5, %s3
  $region1: #{tpu_custom_call.1} parent=0
    #allocation4 [shape = 'u8[8192]{0}', space=vmem, size = 0x2000, scoped, tag = 'output window, operand 0']
    #allocation5 [shape = 's32[2]{0}', space=sflag, size = 0x8, scoped, tag = 'scoped memory for tpu_custom_call.1']
    %7 = vsyncpa [#allocation5], 0
    %s8 = scalar_lea.sflag [#allocation5], 1
    %9 = vsyncpa %s8, 0
    loop: start=0, step=1, limit=4
    $region2: #{tpu_custom_call.1} parent=1 // loop_pre_header
      _
    $region3: #{tpu_custom_call.1} parent=1 // loop_header
      %s11 = sphi 0, %s15
      %p12 = scmp.ge.s32.totalorder %s11, 4
      %s18 = sphi 0, %s30
      %s19 = sphi 0, %s26
      %s20 = sphi 0, %s18
      %s21 = sphi 0, %s19
      %s22 = sphi 0, %s20
      %s23 = sphi 0, %s21
      %s35 = sphi 0, %s37
      %s38 = sphi 0, %s35
      %s39 = sphi 0, %s38
      %s55 = sphi 0, %s39
      %s61 = sphi 0, %s63
      %s64 = sphi 0, %s61
      %s65 = sphi 0, %s64
      %s81 = sphi 0, %s65
      %s87 = sphi 0, %s89
      %s90 = sphi 0, %s87
      %s91 = sphi 0, %s90
      %s107 = sphi 0, %s91
    $region4: #{tpu_custom_call.1} parent=1 // loop_header_branch
      %14 = sbr.rel (%p12) target = $region8
    $region5: #{tpu_custom_call.1} parent=1 // loop_body
      %s16 = ssub.s32 %s11, 1
      %s17 = ssub.s32 %s11, 2
      %s24 = sadd.s32 1, %s19
      %p25 = scmp.ge.s32.totalorder %s24, 1
      %s26 = scalar_select %p25, 0, %s24
      %s27 = sadd.s32 1, %s18
      %s28 = scalar_select %p25, %s27, %s18
      %p29 = scmp.ge.s32.totalorder %s28, 2
      %s30 = scalar_select %p29, 0, %s28
      %s31 = ssub.s32 %s18, %s30
      %s32 = ssub.s32 %s19, %s26
      %s33 = sor.u32 %s31, %s32
      %p34 = scmp.eq.s32.totalorder %s33, 0
      %s36 = sadd.s32 %s35, 1
      %s37 = scalar_select %p34, %s35, %s36
      %p40 = pneg %p34
      %p41 = scmp.eq.s32.totalorder %s11, 1
      %p42 = por %p40, %p41
      %p43 = scmp.ne.s32.totalorder %s35, %s38
      %p44 = scmp.eq.s32.totalorder %s11, 0
      %p45 = por %p43, %p44
      %p46 = scmp.ne.s32.totalorder %s35, %s38
      %p47 = scmp.eq.s32.totalorder %s16, 1
      %p48 = por %p46, %p47
      %p49 = scmp.ne.s32.totalorder %s38, %s39
      %p50 = scmp.eq.s32.totalorder %s16, 0
      %p51 = por %p49, %p50
      %p52 = scmp.ne.s32.totalorder %s38, %s39
      %p53 = scmp.eq.s32.totalorder %s17, 1
      %p54 = por %p52, %p53
      %p56 = scmp.ne.s32.totalorder %s39, %s55
      %p57 = scmp.eq.s32.totalorder %s17, 0
      %p58 = por %p56, %p57
      %s59 = ssub.s32 %s18, %s30
      %p60 = scmp.eq.s32.totalorder %s59, 0
      %s62 = sadd.s32 %s61, 1
      %s63 = scalar_select %p60, %s61, %s62
      %p66 = pneg %p60
      %p67 = scmp.eq.s32.totalorder %s11, 1
      %p68 = por %p66, %p67
      %p69 = scmp.ne.s32.totalorder %s61, %s64
      %p70 = scmp.eq.s32.totalorder %s11, 0
      %p71 = por %p69, %p70
      %p72 = scmp.ne.s32.totalorder %s61, %s64
      %p73 = scmp.eq.s32.totalorder %s16, 1
      %p74 = por %p72, %p73
      %p75 = scmp.ne.s32.totalorder %s64, %s65
      %p76 = scmp.eq.s32.totalorder %s16, 0
      %p77 = por %p75, %p76
      %p78 = scmp.ne.s32.totalorder %s64, %s65
      %p79 = scmp.eq.s32.totalorder %s17, 1
      %p80 = por %p78, %p79
      %p82 = scmp.ne.s32.totalorder %s65, %s81
      %p83 = scmp.eq.s32.totalorder %s17, 0
      %p84 = por %p82, %p83
      %s85 = ssub.s32 %s18, %s30
      %p86 = scmp.eq.s32.totalorder %s85, 0
      %s88 = sadd.s32 %s87, 1
      %s89 = scalar_select %p86, %s87, %s88
      %p92 = pneg %p86
      %p93 = scmp.eq.s32.totalorder %s11, 1
      %p94 = por %p92, %p93
      %p95 = scmp.ne.s32.totalorder %s87, %s90
      %p96 = scmp.eq.s32.totalorder %s11, 0
      %p97 = por %p95, %p96
      %p98 = scmp.ne.s32.totalorder %s87, %s90
      %p99 = scmp.eq.s32.totalorder %s16, 1
      %p100 = por %p98, %p99
      %p101 = scmp.ne.s32.totalorder %s90, %s91
      %p102 = scmp.eq.s32.totalorder %s16, 0
      %p103 = por %p101, %p102
      %p104 = scmp.ne.s32.totalorder %s90, %s91
      %p105 = scmp.eq.s32.totalorder %s17, 1
      %p106 = por %p104, %p105
      %p108 = scmp.ne.s32.totalorder %s91, %s107
      %p109 = scmp.eq.s32.totalorder %s17, 0
      %p110 = por %p108, %p109
      %p111 = scmp.le.s32.totalorder 1, %s11
      %p112 = scmp.lt.s32.totalorder %s11, 3
      %p113 = pnand %p111, %p112
      %p114 = pneg %p113
      // Predicated region
      $region9: #{tpu_custom_call.1} parent=5 // pred_check
        _
      $region10: #{tpu_custom_call.1} parent=5 // pred_check_branch
        %116 = sbr.rel (%p113) target = $region12
      $region11: #{tpu_custom_call.1} parent=5 // pred_region
        %s117 = ssub.s32 %s11, 1
      $region12: #{tpu_custom_call.1} parent=5 // pred_fallthru
        _
      %p118 = scmp.lt.s32.totalorder %s11, 2
      // Predicated region
      $region13: #{tpu_custom_call.1} parent=5 // pred_check
        %p119 = pneg %p118
      $region14: #{tpu_custom_call.1} parent=5 // pred_check_branch
        %121 = sbr.rel (%p119) target = $region16
      $region15: #{tpu_custom_call.1} parent=5 // pred_region
        // Predicated region
        $region17: #{tpu_custom_call.1} parent=15 // pred_check
          %p122 = pneg %p45
        $region18: #{tpu_custom_call.1} parent=15 // pred_check_branch
          %124 = sbr.rel (%p122) target = $region20
        $region19: #{tpu_custom_call.1} parent=15 // pred_region
          %p125 = scmp.lt.s32.totalorder %s18, 1
          %s126 = scalar_select %p125, %s18, 1
          %p127 = scmp.lt.s32.totalorder %s19, 0
          %s128 = scalar_select %p127, %s19, 0
          %s129 = sadd.s32 %s128, %s126
          %s130 = smul.addr %s129, 8
          %s131 = scalar_lea.vmem %s0, %s130
        $region20: #{tpu_custom_call.1} parent=15 // pred_fallthru
          _
        // Predicated region
        $region21: #{tpu_custom_call.1} parent=15 // pred_check
          %p132 = pneg %p71
        $region22: #{tpu_custom_call.1} parent=15 // pred_check_branch
          %134 = sbr.rel (%p132) target = $region24
        $region23: #{tpu_custom_call.1} parent=15 // pred_region
          %p135 = scmp.lt.s32.totalorder %s18, 1
          %s136 = scalar_select %p135, %s18, 1
          %s137 = smul.addr %s136, 8
          %s138 = scalar_lea.vmem %s1, %s137
        $region24: #{tpu_custom_call.1} parent=15 // pred_fallthru
          _
      $region16: #{tpu_custom_call.1} parent=5 // pred_fallthru
        _
      %p139 = scmp.le.s32.totalorder 1, %s11
      %p140 = scmp.lt.s32.totalorder %s11, 3
      %p141 = pnand %p139, %p140
      %p142 = pneg %p141
      // Predicated region
      $region25: #{tpu_custom_call.1} parent=5 // pred_check
        _
      $region26: #{tpu_custom_call.1} parent=5 // pred_check_branch
        %144 = sbr.rel (%p141) target = $region28
      $region27: #{tpu_custom_call.1} parent=5 // pred_region
        %s145 = ssub.s32 %s11, 1
        %p146 = scmp.lt.s32.totalorder %s20, 1
        %s147 = scalar_select %p146, %s20, 1
        %p148 = scmp.lt.s32.totalorder %s21, 0
        %s149 = scalar_select %p148, %s21, 0
        %s150 = sadd.s32 %s149, %s147
        %s151 = smul.addr %s150, 8
        %s152 = scalar_lea.vmem %s0, %s151
        %p153 = pneg %p51
        %p154 = pneg %p48
        %p155 = scmp.lt.s32.totalorder %s20, 1
        %s156 = scalar_select %p155, %s20, 1
        %s157 = smul.addr %s156, 8
        %s158 = scalar_lea.vmem %s1, %s157
        %p159 = pneg %p77
        %p160 = pneg %p74
        %p161 = pneg %p103
        %p162 = pneg %p100
        %s163 = sand.u32 %s90, 1
        %s164 = scalar_lea.sflag [#allocation5], %s163
        %s165 = sand.u32 %s90, 1
        %s166 = smul.addr %s165, 8
        %s167 = scalar_lea.vmem [#allocation4], %s166
        %p168 = scmp.lt.s32.totalorder %s20, 1
        %s169 = scalar_select %p168, %s20, 1
        %p170 = scmp.lt.s32.totalorder %s21, 0
        %s171 = scalar_select %p170, %s21, 0
        %s172 = sadd.s32 %s171, %s169
        %s173 = smul.addr %s172, 8
        %s174 = scalar_lea.vmem %s0, %s173
        %p175 = scmp.lt.s32.totalorder %s20, 1
        %s176 = scalar_select %p175, %s20, 1
        %s177 = smul.addr %s176, 8
        %s178 = scalar_lea.vmem %s1, %s177
        %p179 = scmp.eq.s32.totalorder %s21, 0
        // Predicated region
        $region29: #{tpu_custom_call.1} parent=27 // pred_check
          %p180 = pneg %p179
        $region30: #{tpu_custom_call.1} parent=27 // pred_check_branch
          %182 = sbr.rel (%p180) target = $region32
        $region31: #{tpu_custom_call.1} parent=27 // pred_region
          %vm183 = vcmask 7168
          %184 = vst.msk [vmem:[#allocation2] sm:$0xff] %vm183, -inf
          %185 = vst.msk [vmem:[#allocation3] sm:$0xff] %vm183, 0
        $region32: #{tpu_custom_call.1} parent=27 // pred_fallthru
          _
        %v186 = vlaneseq
        %v187 = vand.u32 %v186, 127
        %v188 = vld [vmem:[%s174] sm:$0xff]
        %vm189 = vcmask 261120
        %v190 = vsel %vm189, %v188, -inf
        %191 = vmax.xlane.f32.xlu0 %v190
        %v192 = vpop.xlane.xlu0 %191
        %vm193 = vcmp.eq.f32.partialorder %v188, %v192
        %v194 = vsel %vm193, %v187, 32
        %v195 = vsel %vm189, %v194, 2147483647
        %v196 = vand.u32 %v195, 65535
        %v197 = vshra.s32 %v195, 16
        %v198 = vcvt.s32.f32 %v196
        %v199 = vcvt.s32.f32 %v197
        %200 = vmin.xlane.f32.xlu0 %v199
        %v201 = vpop.xlane.xlu0 %200
        %vm202 = vcmp.eq.f32.partialorder %v199, %v201
        %v203 = vsel %vm202, %v198, inf
        %204 = vmin.xlane.f32.xlu0 %v203
        %v205 = vpop.xlane.xlu0 %204
        %v206 = vcvt.f32.s32 %v205
        %v207 = vcvt.f32.s32 %v201
        %v208 = vshll.u32 %v207, 16
        %v209 = vadd.s32 %v208, %v206
        %v210 = vld [vmem:[#allocation2] sm:$0xff]
        %v211 = vld [vmem:[#allocation3] sm:$0xff]
        %vm212 = vcmp.gt.f32.partialorder %v192, %v210
        %v213 = vsel %vm212, %v192, %v210
        %s214 = smul.u32 %s21, 32
        %v215 = vstv %s214
        %v216 = vadd.s32 %v209, %v215
        %v217 = vsel %vm212, %v216, %v211
        %vm218 = vcmask 7168
        %219 = vst.msk [vmem:[#allocation2] sm:$0xff] %vm218, %v213
        %220 = vst.msk [vmem:[#allocation3] sm:$0xff] %vm218, %v217
        %v221 = vld [vmem:[%s178] sm:$0xff]
        %s222 = smul.u32 %s20, 8
        %v223 = vlaneseq
        %v224 = vshrl.u32 %v223, 7
        %v225 = vstv %s222
        %v226 = vadd.s32 %v225, %v224
        %vm227 = vcmp.eq.s32.totalorder %v217, %v221
        %vm228 = vcmp.lt.s32.totalorder %v226, 16
        %vm229 = vmand %vm227, %vm228
        %v230 = vsel %vm229, 1, 0
        %v231 = vsel %vm218, %v230, 0
        %v232 = vand.u32 %v231, 65535
        %v233 = vshrl.u32 %v231, 16
        %v234 = vcvt.s32.f32 %v232
        %v235 = vcvt.s32.f32 %v233
        %236 = vadd.xlane.f32.xlu0 %v234
        %v237 = vpop.xlane.xlu0 %236
        %238 = vadd.xlane.f32.xlu0 %v235
        %v239 = vpop.xlane.xlu0 %238
        %v240 = vcvt.f32.s32 %v237
        %v241 = vcvt.f32.s32 %v239
        %v242 = vshll.u32 %v241, 16
        %v243 = vadd.s32 %v242, %v240
        %v244 = vrot.slane %v243, 4
        %v245 = vadd.s32 %v243, %v244
        %v246 = vrot.slane %v245, 2
        %v247 = vadd.s32 %v245, %v246
        %v248 = vrot.slane %v247, 1
        %v249 = vadd.s32 %v247, %v248
        %s250 = vtos %v249
        %s251 = scalar_select %p179, %s250, 0
        // Predicated region
        $region33: #{tpu_custom_call.1} parent=27 // pred_check
          %p252 = pneg %p179
        $region34: #{tpu_custom_call.1} parent=27 // pred_check_branch
          %254 = sbr.rel (%p252) target = $region36
        $region35: #{tpu_custom_call.1} parent=27 // pred_region
          %v255 = vstv %s251
          %256 = vst [vmem:[%s167] sm:$0xff] %v255
        $region36: #{tpu_custom_call.1} parent=27 // pred_fallthru
          _
        %s257 = sand.u32 %s90, 1
        %s258 = scalar_lea.sflag [#allocation5], %s257
        %s259 = sand.u32 %s90, 1
        %s260 = smul.addr %s259, 8
        %s261 = scalar_lea.vmem [#allocation4], %s260
        // Predicated region
        $region37: #{tpu_custom_call.1} parent=27 // pred_check
          %p262 = pneg %p100
        $region38: #{tpu_custom_call.1} parent=27 // pred_check_branch
          %264 = sbr.rel (%p262) target = $region40
        $region39: #{tpu_custom_call.1} parent=27 // pred_region
          %s266 = ssub.s32 128, 128
          %267 = vsyncadd %s258, %s266
          %s268 = smul.addr %s20, 128
          %s269 = scalar_lea.hbm %s2, %s268
          %s271 = sshll.u32 %s261, 4
          %s272 = int_to_ptr.vmem [resolvable:$true] %s271
          %274 = dma.vmem_to_hbm [thread:$0]  %s272, 128, %s269, %s258
        $region40: #{tpu_custom_call.1} parent=27 // pred_fallthru
          _
      $region28: #{tpu_custom_call.1} parent=5 // pred_fallthru
        _
      %p275 = scmp.le.s32.totalorder 2, %s11
      // Predicated region
      $region41: #{tpu_custom_call.1} parent=5 // pred_check
        %p276 = pneg %p275
      $region42: #{tpu_custom_call.1} parent=5 // pred_check_branch
        %278 = sbr.rel (%p276) target = $region44
      $region43: #{tpu_custom_call.1} parent=5 // pred_region
        %s279 = ssub.s32 %s11, 2
        // Predicated region
        $region45: #{tpu_custom_call.1} parent=43 // pred_check
          %p280 = pneg %p106
        $region46: #{tpu_custom_call.1} parent=43 // pred_check_branch
          %282 = sbr.rel (%p280) target = $region48
        $region47: #{tpu_custom_call.1} parent=43 // pred_region
          %s283 = sand.u32 %s91, 1
          %s284 = scalar_lea.sflag [#allocation5], %s283
          %s285 = sand.u32 %s91, 1
          %s286 = smul.addr %s285, 8
          %s287 = scalar_lea.vmem [#allocation4], %s286
          %288 = dma.done %s284, 128
        $region48: #{tpu_custom_call.1} parent=43 // pred_fallthru
          _
      $region44: #{tpu_custom_call.1} parent=5 // pred_fallthru
        _
    $region6: #{tpu_custom_call.1} parent=1 // loop_footer
      %s15 = sadd.s32 1, %s11
    $region7: #{tpu_custom_call.1} parent=1 // loop_footer_branch
      %10 = sbr.rel target = $region3
    $region8: #{tpu_custom_call.1} parent=1 // loop_exit
      _
    %289 = vsyncpa [#allocation5], 1
    %s290 = scalar_lea.sflag [#allocation5], 1
    %291 = vsyncpa %s290, 1

</llo_original>
